<compile_context>
chip_gen: v7x
topology: tpu7x:2x2x1
jax: 0.10.0
libtpu: 0.0.40
codegen_flags: <defaults>
</compile_context>

<pallas_src>
import functools

import jax
import jax.numpy as jnp
from jax.experimental import pallas as pl
from jax.experimental.pallas import tpu as pltpu


def _fnn_fused_kernel(*refs, n_layers: int):
    """Fused MLP on one batch tile.

    refs = (x_tile, w0, b0, w1, b1, ..., w_{n-1}, b_{n-1}, out_tile)
      x_tile : (TB, d_in)        natural layout
      w_i    : (d_out_i, d_in_i)
      b_i    : (d_out_i, 1)
      out    : (d_out, TB)       batch on lanes (lane-dense store)
    """
    x_ref = refs[0]
    out_ref = refs[-1]
    p_refs = refs[1:-1]

    x = x_ref[...].astype(jnp.float32)                       # (TB, d_in)

    # Layer 0: contract feature axes -> h is (h1, TB); batch lands on the lane axis.
    w0 = p_refs[0][...]                                      # (h1, d_in)
    b0 = p_refs[1][...]                                      # (h1, 1)
    h = jax.lax.dot_general(
        w0, x, dimension_numbers=(((1,), (1,)), ((), ())),
        preferred_element_type=jnp.float32) + b0             # (h1, TB)
    if n_layers > 1:
        h = jnp.sin(h)                                       # Sine(w0=1)

    for i in range(1, n_layers):
        w = p_refs[2 * i][...]                               # (d_out_i, d_in_i)
        b = p_refs[2 * i + 1][...]                           # (d_out_i, 1)
        h = jnp.dot(w, h, preferred_element_type=jnp.float32) + b
        if i < n_layers - 1:
            # exact GELU (erf form) -- matches torch.nn.GELU() default
            h = 0.5 * h * (1.0 + jax.lax.erf(h * jnp.float32(0.7071067811865476)))

    out_ref[...] = h.astype(out_ref.dtype)


def init_fnn_params(key, layers_all):
    """PyTorch-Linear-like uniform init; stored kernel-ready: w (d_out,d_in), b (d_out,1)."""
    params = []
    for d_in, d_out in zip(layers_all[:-1], layers_all[1:]):
        key, kw, kb = jax.random.split(key, 3)
        bound = 1.0 / jnp.sqrt(jnp.float32(d_in))
        w = jax.random.uniform(kw, (d_out, d_in), jnp.float32, -bound, bound)
        b = jax.random.uniform(kb, (d_out, 1), jnp.float32, -bound, bound)
        params.append((w, b))
    return params


def fnn_forward(params, x, *, batch_tile=8192):
    """FNN forward. x: (batch, d_in) -> (batch, d_out). Single fused Pallas kernel."""
    n = len(params)
    batch, d_in = x.shape
    d_out = params[-1][0].shape[0]

    # Batch tile selection:
    #  - small batches: one full-array block (block dims == array dims, no (8,128) issue)
    #  - otherwise: multiple of 128 (lane-dense output blocks), capped both by
    #    batch_tile and by ceil(batch/2) so the parallel grid has >= 2 steps
    #    (keeps both TensorCores busy on dual-TC chips).
    if batch < 256:
        tb = batch
    else:
        half = pl.cdiv(pl.cdiv(batch, 2), 128) * 128
        tb = max(128, min((batch_tile // 128) * 128, half))
    grid = (pl.cdiv(batch, tb),)

    in_specs = [pl.BlockSpec((tb, d_in), lambda i: (i, 0))]   # natural layout, no pad
    args = [x]
    for w, b in params:
        do, di = w.shape
        # Constant index_map -> weights/bias stay VMEM-resident across grid steps.
        in_specs.append(pl.BlockSpec((do, di), lambda i: (0, 0)))
        in_specs.append(pl.BlockSpec((do, 1), lambda i: (0, 0)))
        args.append(w)
        args.append(b)

    out_t = pl.pallas_call(
        functools.partial(_fnn_fused_kernel, n_layers=n),
        out_shape=jax.ShapeDtypeStruct((d_out, batch), x.dtype),
        grid=grid,
        in_specs=in_specs,
        out_specs=pl.BlockSpec((d_out, tb), lambda i: (0, i)),
        compiler_params=pltpu.CompilerParams(
            dimension_semantics=("parallel",),
            vmem_limit_bytes=48 * 1024 * 1024,
        ),
    )(*args)

    # Back to (batch, d_out). Tail blocks were clamped by Pallas; nothing to slice.
    return out_t.T


fnn_forward_jit = jax.jit(fnn_forward, static_argnames=("batch_tile",))


def _reference(params, x):
    """Plain-JAX reference with identical math (full-f32 matmuls)."""
    n = len(params)
    h = x
    for i, (w, b) in enumerate(params):
        h = jnp.dot(h, w.T, precision=jax.lax.Precision.HIGHEST) + b.reshape(-1)
        if i == n - 1:
            pass
        elif i == 0:
            h = jnp.sin(h)
        else:
            h = 0.5 * h * (1.0 + jax.lax.erf(h / jnp.sqrt(2.0)))
    return h


if __name__ == "__main__":
    key = jax.random.PRNGKey(0)
    key, kx1, kx2 = jax.random.split(key, 3)

    # layers_all = [input_dim, hidden..., output_dim]
    layers_all = [4, 32, 32, 1]
    params = init_fnn_params(key, layers_all)

    # Small case (single full-array block, single grid step).
    batch = 8
    x = jax.random.normal(kx1, (batch, layers_all[0]), jnp.float32)
    out = jax.block_until_ready(fnn_forward_jit(params, x))
    ref = _reference(params, x)
    assert out.shape == (batch, layers_all[-1])
    assert jnp.allclose(out, ref, atol=2e-5, rtol=2e-5)

    # Larger case exercising multi-step pipelined grid + clamped partial tail block.
    batch2 = 300
    x2 = jax.random.normal(kx2, (batch2, layers_all[0]), jnp.float32)
    out2 = jax.block_until_ready(fnn_forward_jit(params, x2, batch_tile=128))
    ref2 = _reference(params, x2)
    assert out2.shape == (batch2, layers_all[-1])
    assert jnp.allclose(out2, ref2, atol=2e-5, rtol=2e-5)

    # Same shape through the default (large-tile) path: tb capped at ceil(batch/2)
    # rounded to 128 -> 2 grid steps, partial tail.
    out3 = jax.block_until_ready(fnn_forward_jit(params, x2))
    assert out3.shape == (batch2, layers_all[-1])
    assert jnp.allclose(out3, ref2, atol=2e-5, rtol=2e-5)

    print("KERNEL_OK")
</pallas_src>

<mosaic_0001>
module attributes {stable_mosaic.version = 11 : i64} {
  func.func @_fnn_fused_kernel(%arg0: i32, %arg1: memref<8x4xf32, #tpu.memory_space<vmem>>, %arg2: memref<32x4xf32, #tpu.memory_space<vmem>>, %arg3: memref<32x1xf32, #tpu.memory_space<vmem>>, %arg4: memref<32x32xf32, #tpu.memory_space<vmem>>, %arg5: memref<32x1xf32, #tpu.memory_space<vmem>>, %arg6: memref<1x32xf32, #tpu.memory_space<vmem>>, %arg7: memref<1x1xf32, #tpu.memory_space<vmem>>, %arg8: memref<1x8xf32, #tpu.memory_space<vmem>>) attributes {dimension_semantics = [#tpu.dimension_semantics<parallel>], iteration_bounds = array<i64: 1>, scalar_prefetch = 0 : i64, scratch_operands = 0 : i64, tpu.core_type = #tpu.core_type<tc>, window_params = [{transform_indices = @transform_0, window_bounds = array<i64: 8, 4>}, {pipeline_mode = #tpu.pipeline_mode<synchronous>, transform_indices = @transform_1, window_bounds = array<i64: 32, 4>}, {pipeline_mode = #tpu.pipeline_mode<synchronous>, transform_indices = @transform_2, window_bounds = array<i64: 32, 1>}, {pipeline_mode = #tpu.pipeline_mode<synchronous>, transform_indices = @transform_3, window_bounds = array<i64: 32, 32>}, {pipeline_mode = #tpu.pipeline_mode<synchronous>, transform_indices = @transform_4, window_bounds = array<i64: 32, 1>}, {pipeline_mode = #tpu.pipeline_mode<synchronous>, transform_indices = @transform_5, window_bounds = array<i64: 1, 32>}, {pipeline_mode = #tpu.pipeline_mode<synchronous>, transform_indices = @transform_6, window_bounds = array<i64: 1, 1>}, {transform_indices = @transform_7, window_bounds = array<i64: 1, 8>}]} {
    %c0 = arith.constant 0 : index
    %c0_0 = arith.constant 0 : index
    %0 = vector.load %arg1[%c0, %c0_0] : memref<8x4xf32, #tpu.memory_space<vmem>>, vector<8x4xf32>
    %c0_1 = arith.constant 0 : index
    %c0_2 = arith.constant 0 : index
    %1 = vector.load %arg2[%c0_1, %c0_2] : memref<32x4xf32, #tpu.memory_space<vmem>>, vector<32x4xf32>
    %c0_3 = arith.constant 0 : index
    %c0_4 = arith.constant 0 : index
    %2 = vector.load %arg3[%c0_3, %c0_4] : memref<32x1xf32, #tpu.memory_space<vmem>>, vector<32x1xf32>
    %cst = arith.constant dense<0.000000e+00> : vector<32x8xf32>
    %3 = tpu.matmul %1, %0, %cst {dimension_numbers = #tpu.dot_dimension_numbers<[1], [1], [0], [0], [0, 0, 1, 0], [], []>} : vector<32x4xf32>, vector<8x4xf32>, vector<32x8xf32> -> vector<32x8xf32>
    %4 = vector.broadcast %2 : vector<32x1xf32> to vector<32x8xf32>
    %5 = arith.addf %3, %4 : vector<32x8xf32>
    %6 = math.sin %5 : vector<32x8xf32>
    %c0_5 = arith.constant 0 : index
    %c0_6 = arith.constant 0 : index
    %7 = vector.load %arg4[%c0_5, %c0_6] : memref<32x32xf32, #tpu.memory_space<vmem>>, vector<32x32xf32>
    %c0_7 = arith.constant 0 : index
    %c0_8 = arith.constant 0 : index
    %8 = vector.load %arg5[%c0_7, %c0_8] : memref<32x1xf32, #tpu.memory_space<vmem>>, vector<32x1xf32>
    %cst_9 = arith.constant dense<0.000000e+00> : vector<32x8xf32>
    %9 = tpu.matmul %7, %6, %cst_9 {dimension_numbers = #tpu.dot_dimension_numbers<[1], [0], [0], [1], [0, 0, 1, 1], [], []>} : vector<32x32xf32>, vector<32x8xf32>, vector<32x8xf32> -> vector<32x8xf32>
    %10 = vector.broadcast %8 : vector<32x1xf32> to vector<32x8xf32>
    %11 = arith.addf %9, %10 : vector<32x8xf32>
    %cst_10 = arith.constant 5.000000e-01 : f32
    %12 = vector.broadcast %cst_10 : f32 to vector<32x8xf32>
    %13 = arith.mulf %12, %11 : vector<32x8xf32>
    %cst_11 = arith.constant 0.707106769 : f32
    %14 = vector.broadcast %cst_11 : f32 to vector<32x8xf32>
    %15 = arith.mulf %11, %14 : vector<32x8xf32>
    %16 = math.erf %15 : vector<32x8xf32>
    %cst_12 = arith.constant 1.000000e+00 : f32
    %17 = vector.broadcast %cst_12 : f32 to vector<32x8xf32>
    %18 = arith.addf %17, %16 : vector<32x8xf32>
    %19 = arith.mulf %13, %18 : vector<32x8xf32>
    %c0_13 = arith.constant 0 : index
    %c0_14 = arith.constant 0 : index
    %20 = vector.load %arg6[%c0_13, %c0_14] : memref<1x32xf32, #tpu.memory_space<vmem>>, vector<1x32xf32>
    %c0_15 = arith.constant 0 : index
    %c0_16 = arith.constant 0 : index
    %21 = vector.load %arg7[%c0_15, %c0_16] : memref<1x1xf32, #tpu.memory_space<vmem>>, vector<1x1xf32>
    %cst_17 = arith.constant dense<0.000000e+00> : vector<1x8xf32>
    %22 = tpu.matmul %20, %19, %cst_17 {dimension_numbers = #tpu.dot_dimension_numbers<[1], [0], [0], [1], [0, 0, 1, 1], [], []>} : vector<1x32xf32>, vector<32x8xf32>, vector<1x8xf32> -> vector<1x8xf32>
    %23 = vector.broadcast %21 : vector<1x1xf32> to vector<1x8xf32>
    %24 = arith.addf %22, %23 : vector<1x8xf32>
    %c0_18 = arith.constant 0 : index
    %c0_19 = arith.constant 0 : index
    %25 = vector.load %arg8[%c0_18, %c0_19] : memref<1x8xf32, #tpu.memory_space<vmem>>, vector<1x8xf32>
    tpu.vector_store %arg8[%c0_18, %c0_19], %24 {strides = array<i32>} : memref<1x8xf32, #tpu.memory_space<vmem>>, vector<1x8xf32>,
    return
  }
  func.func @transform_0(%arg0: i32) -> (i32, i32) {
    %c0_i32 = arith.constant 0 : i32
    %c0_i32_0 = arith.constant 0 : i32
    return %arg0, %c0_i32 : i32, i32
  }
  func.func @transform_1(%arg0: i32) -> (i32, i32) {
    %c0_i32 = arith.constant 0 : i32
    %c0_i32_0 = arith.constant 0 : i32
    %c0_i32_1 = arith.constant 0 : i32
    return %c0_i32, %c0_i32_0 : i32, i32
  }
  func.func @transform_2(%arg0: i32) -> (i32, i32) {
    %c0_i32 = arith.constant 0 : i32
    %c0_i32_0 = arith.constant 0 : i32
    %c0_i32_1 = arith.constant 0 : i32
    return %c0_i32, %c0_i32_0 : i32, i32
  }
  func.func @transform_3(%arg0: i32) -> (i32, i32) {
    %c0_i32 = arith.constant 0 : i32
    %c0_i32_0 = arith.constant 0 : i32
    %c0_i32_1 = arith.constant 0 : i32
    return %c0_i32, %c0_i32_0 : i32, i32
  }
  func.func @transform_4(%arg0: i32) -> (i32, i32) {
    %c0_i32 = arith.constant 0 : i32
    %c0_i32_0 = arith.constant 0 : i32
    %c0_i32_1 = arith.constant 0 : i32
    return %c0_i32, %c0_i32_0 : i32, i32
  }
  func.func @transform_5(%arg0: i32) -> (i32, i32) {
    %c0_i32 = arith.constant 0 : i32
    %c0_i32_0 = arith.constant 0 : i32
    %c0_i32_1 = arith.constant 0 : i32
    return %c0_i32, %c0_i32_0 : i32, i32
  }
  func.func @transform_6(%arg0: i32) -> (i32, i32) {
    %c0_i32 = arith.constant 0 : i32
    %c0_i32_0 = arith.constant 0 : i32
    %c0_i32_1 = arith.constant 0 : i32
    return %c0_i32, %c0_i32_0 : i32, i32
  }
  func.func @transform_7(%arg0: i32) -> (i32, i32) {
    %c0_i32 = arith.constant 0 : i32
    %c0_i32_0 = arith.constant 0 : i32
    return %c0_i32, %arg0 : i32, i32
  }
}

</mosaic_0001>

<llo_original>
// kernel: fnn_forward.1
$region0: #{fnn_forward.1}
  #allocation0 [shape = 'u32[]', space=smem, size = 0x4, offset = 0x4, fixed_abs, tag = 'smem constant byte address 0x4 - core index']
  #allocation1 [shape = 'u32[144,128]{1,0:T(1,128)}', space=vmem, size = 0x12000, scoped, tag = 'internal scratch']
  #allocation2 [shape = 'f32[1,1]{1,0:T(1,128)S(1)}', space=vmem, size = 0x200, scoped, tag = 'scoped memory for fnn_forward.1']
  %s0 = inlined_call_operand.vmem [shape: f32[8,4], index: 0, kind: input, shape index: {}]
  %s1 = inlined_call_operand.vmem [shape: f32[32,4], index: 1, kind: input, shape index: {}]
  %s2 = inlined_call_operand.vmem [shape: f32[32,1], index: 2, kind: input, shape index: {}]
  %s3 = inlined_call_operand.vmem [shape: f32[32,32], index: 3, kind: input, shape index: {}]
  %s4 = inlined_call_operand.vmem [shape: f32[32,1], index: 4, kind: input, shape index: {}]
  %s5 = inlined_call_operand.vmem [shape: f32[1,32], index: 5, kind: input, shape index: {}]
  %s6 = inlined_call_operand.<no memory space> [shape: f32[1,1], index: 6, kind: input, shape index: {}]
  %s7 = inlined_call_operand.hbm [shape: f32[1,8], index: 7, kind: output, shape index: {}]
  %s8 = sld [smem:[#allocation0]]
  $region38: #{fnn_forward.1} parent=0
    _
  %s10 = ssub.s32 1, %s8
  %s11 = scalar_select 0, %s10, %s8
  %v12 = vstv %s6
  %13 = vst [vmem:[#allocation2] sm:$0x1] %v12
  $region1: #{fnn_forward.1} parent=0
    #allocation3 [shape = 'u8[512]{0}', space=vmem, size = 0x400, scoped, tag = 'output window, operand 0, single buffered']
    #allocation4 [shape = 's32[1]{0}', space=sflag, size = 0x4, scoped, tag = 'scoped memory for fnn_forward.1']
    %14 = vsyncpa [#allocation4], 0
    // Predicated region
    $region2: #{fnn_forward.1} parent=1 // pred_check
      _
    $region3: #{fnn_forward.1} parent=1 // pred_check_branch
      %16 = sbr.rel (0) target = $region5
    $region4: #{fnn_forward.1} parent=1 // pred_region
      _
    $region5: #{fnn_forward.1} parent=1 // pred_fallthru
      _
    // Predicated region
    $region6: #{fnn_forward.1} parent=1 // pred_check
      _
    $region7: #{fnn_forward.1} parent=1 // pred_check_branch
      %18 = sbr.rel (0) target = $region9
    $region8: #{fnn_forward.1} parent=1 // pred_region
      _
    $region9: #{fnn_forward.1} parent=1 // pred_fallthru
      _
    // Predicated region
    $region10: #{fnn_forward.1} parent=1 // pred_check
      _
    $region11: #{fnn_forward.1} parent=1 // pred_check_branch
      %20 = sbr.rel (0) target = $region13
    $region12: #{fnn_forward.1} parent=1 // pred_region
      _
    $region13: #{fnn_forward.1} parent=1 // pred_fallthru
      _
    // Predicated region
    $region14: #{fnn_forward.1} parent=1 // pred_check
      _
    $region15: #{fnn_forward.1} parent=1 // pred_check_branch
      %22 = sbr.rel (0) target = $region17
    $region16: #{fnn_forward.1} parent=1 // pred_region
      _
    $region17: #{fnn_forward.1} parent=1 // pred_fallthru
      _
    // Predicated region
    $region18: #{fnn_forward.1} parent=1 // pred_check
      _
    $region19: #{fnn_forward.1} parent=1 // pred_check_branch
      %24 = sbr.rel (0) target = $region21
    $region20: #{fnn_forward.1} parent=1 // pred_region
      _
    $region21: #{fnn_forward.1} parent=1 // pred_fallthru
      _
    // Predicated region
    $region22: #{fnn_forward.1} parent=1 // pred_check
      _
    $region23: #{fnn_forward.1} parent=1 // pred_check_branch
      %26 = sbr.rel (0) target = $region25
    $region24: #{fnn_forward.1} parent=1 // pred_region
      _
    $region25: #{fnn_forward.1} parent=1 // pred_fallthru
      _
    // Predicated region
    $region26: #{fnn_forward.1} parent=1 // pred_check
      _
    $region27: #{fnn_forward.1} parent=1 // pred_check_branch
      %28 = sbr.rel (0) target = $region29
    $region28: #{fnn_forward.1} parent=1 // pred_region
      _
    $region29: #{fnn_forward.1} parent=1 // pred_fallthru
      _
    %v29 = vld [vmem:[%s0] sm:$0xff]
    %v30 = vld [vmem:[%s1] sm:$0xff]
    %v31 = vld [vmem:[%s1 + $0x8] sm:$0xff]
    %v32 = vld [vmem:[%s1 + $0x10] sm:$0xff]
    %v33 = vld [vmem:[%s1 + $0x18] sm:$0xff]
    %v34 = vld [vmem:[%s2] sm:$0xff]
    %v35 = vld [vmem:[%s2 + $0x8] sm:$0xff]
    %v36 = vld [vmem:[%s2 + $0x10] sm:$0xff]
    %v37 = vld [vmem:[%s2 + $0x18] sm:$0xff]
    %39 = vset.pattern.permute.xlu0 0
    %40 = vperm.xlu0 %39, %v34
    %v41 = vpop.permute.xlu0 %40
    %44 = vset.pattern.permute.xlu0 0
    %45 = vperm.xlu0 %44, %v35
    %v46 = vpop.permute.xlu0 %45
    %49 = vset.pattern.permute.xlu0 0
    %50 = vperm.xlu0 %49, %v36
    %v51 = vpop.permute.xlu0 %50
    %54 = vset.pattern.permute.xlu0 0
    %55 = vperm.xlu0 %54, %v37
    %v56 = vpop.permute.xlu0 %55
    %vm58 = vcmask 31744
    %v60 = vsel %vm58, %v30, 0
    %v63 = vsel %vm58, %v31, 0
    %v66 = vsel %vm58, %v32, 0
    %v69 = vsel %vm58, %v33, 0
    %v72 = vsel %vm58, %v29, 0
    %74 = vmatprep.subr.mxu0 0.0
    %75 = vmatpush1.xpose.msra.mxu0 %v72
    %76 = vmatprep.subr.mxu0 0.0
    %77 = vmatpush1.xpose.msra.mxu0 0.0
    %78 = vmatprep.subr.mxu0 0.0
    %79 = vmatpush1.xpose.msra.mxu0 0.0
    %80 = vmatprep.subr.mxu0 0.0
    %81 = vmatpush1.xpose.msra.mxu0 0.0
    %82 = vmatprep.subr.mxu0 0.0
    %83 = vmatpush1.xpose.msra.mxu0 0.0
    %84 = vmatprep.subr.mxu0 0.0
    %85 = vmatpush1.xpose.msra.mxu0 0.0
    %86 = vmatprep.subr.mxu0 0.0
    %87 = vmatpush1.xpose.msra.mxu0 0.0
    %88 = vmatprep.subr.mxu0 0.0
    %89 = vmatpush1.xpose.msra.mxu0 0.0
    %90 = vmatprep.subr.mxu0 0.0
    %91 = vmatpush1.xpose.msra.mxu0 0.0
    %92 = vmatprep.subr.mxu0 0.0
    %93 = vmatpush1.xpose.msra.mxu0 0.0
    %94 = vmatprep.subr.mxu0 0.0
    %95 = vmatpush1.xpose.msra.mxu0 0.0
    %96 = vmatprep.subr.mxu0 0.0
    %97 = vmatpush1.xpose.msra.mxu0 0.0
    %98 = vmatprep.subr.mxu0 0.0
    %99 = vmatpush1.xpose.msra.mxu0 0.0
    %100 = vmatprep.subr.mxu0 0.0
    %101 = vmatpush1.xpose.msra.mxu0 0.0
    %102 = vmatprep.subr.mxu0 0.0
    %103 = vmatpush1.xpose.msra.mxu0 0.0
    %104 = vmatprep.subr.mxu0 0.0
    %105 = vmatpush1.xpose.msra.mxu0 0.0
    %106 = vmatprep.subr.mxu0 0.0
    %107 = vmatpush1.xpose.msra.mxu0 0.0
    %108 = vmatprep.subr.mxu0 0.0
    %109 = vmatpush1.xpose.msra.mxu0 0.0
    %110 = vmatprep.subr.mxu0 0.0
    %111 = vmatpush1.xpose.msra.mxu0 0.0
    %112 = vmatprep.subr.mxu0 0.0
    %113 = vmatpush1.xpose.msra.mxu0 0.0
    %114 = vmatprep.subr.mxu0 0.0
    %115 = vmatpush1.xpose.msra.mxu0 0.0
    %116 = vmatprep.subr.mxu0 0.0
    %117 = vmatpush1.xpose.msra.mxu0 0.0
    %118 = vmatprep.subr.mxu0 0.0
    %119 = vmatpush1.xpose.msra.mxu0 0.0
    %120 = vmatprep.subr.mxu0 0.0
    %121 = vmatpush1.xpose.msra.mxu0 0.0
    %122 = vmatprep.subr.mxu0 0.0
    %123 = vmatpush1.xpose.msra.mxu0 0.0
    %124 = vmatprep.subr.mxu0 0.0
    %125 = vmatpush1.xpose.msra.mxu0 0.0
    %126 = vmatprep.subr.mxu0 0.0
    %127 = vmatpush1.xpose.msra.mxu0 0.0
    %128 = vmatprep.subr.mxu0 0.0
    %129 = vmatpush1.xpose.msra.mxu0 0.0
    %130 = vmatprep.subr.mxu0 0.0
    %131 = vmatpush1.xpose.msra.mxu0 0.0
    %132 = vmatprep.subr.mxu0 0.0
    %133 = vmatpush1.xpose.msra.mxu0 0.0
    %134 = vmatprep.subr.mxu0 0.0
    %135 = vmatpush1.xpose.msra.mxu0 0.0
    %136 = vmatprep.subr.mxu0 0.0
    %137 = vmatpush1.xpose.msra.mxu0 0.0
    %138 = vmatprep.mubr.f32.mxu0 0.0
    %139 = vmatmul.mubr.f32.gmra.mrb[0].mxu0 %v60
    %v140 = vpop.f32.mrb[0].mxu0
    %v141 = vadd.f32 %v41, %v140
    %v142 = vpop.f32.mrb[0].mxu0
    %143 = vmatprep.mubr.f32.mxu0 0.0
    %144 = vmatmul.mubr.f32.gmra.mrb[0].mxu0 %v63
    %v145 = vpop.f32.mrb[0].mxu0
    %v146 = vadd.f32 %v46, %v145
    %v147 = vpop.f32.mrb[0].mxu0
    %148 = vmatprep.mubr.f32.mxu0 0.0
    %149 = vmatmul.mubr.f32.gmra.mrb[0].mxu0 %v66
    %v150 = vpop.f32.mrb[0].mxu0
    %v151 = vadd.f32 %v51, %v150
    %v152 = vpop.f32.mrb[0].mxu0
    %153 = vmatprep.mubr.f32.mxu0 0.0
    %154 = vmatmul.mubr.f32.gmra.mrb[0].mxu0 %v69
    %v155 = vpop.f32.mrb[0].mxu0
    %v156 = vadd.f32 %v56, %v155
    %v157 = vpop.f32.mrb[0].mxu0
    %158 = vdwg.mxu0
    %v159 = vand.u32 2147483647, %v141
    %vm160 = vcmp.le.f32.partialorder %v159, 0.7853982
    %vm161 = vcmp.lt.s32.totalorder %v141, 0
    %v162 = vand.u32 %v141, 2139095040
    %v163 = vshrl.u32 %v162, 23
    %v164 = vsub.s32 %v163, 127
    %v165 = vand.u32 2147483647, %v141
    %v166 = vand.u32 %v165, 8388607
    %v167 = vor.u32 %v166, 8388608
    %v168 = vsub.s32 0, %v167
    %v169 = vadd.s32 %v164, 1
    %vm170 = vcmp.gt.s32.totalorder %v169, 0
    %v171 = vsel %vm170, %v169, 0
    %v172 = vshrl.u32 %v171, 5
    %v173 = vand.u32 %v171, 31
    %v174 = vsub.s32 32, %v173
    %v175 = vshrl.u32 683565275, %v174
    %v176 = vshll.u32 683565275, %v173
    %v177 = vshrl.u32 2475754826, %v174
    %v178 = vor.u32 %v176, %v177
    %v179 = vshll.u32 2475754826, %v173
    %v180 = vshrl.u32 2131351028, %v174
    %v181 = vor.u32 %v179, %v180
    %v182 = vshll.u32 2131351028, %v173
    %v183 = vshrl.u32 2102212464, %v174
    %v184 = vor.u32 %v182, %v183
    %v185 = vshll.u32 2102212464, %v173
    %v186 = vshrl.u32 920167782, %v174
    %v187 = vor.u32 %v185, %v186
    %v188 = vshll.u32 920167782, %v173
    %v189 = vshrl.u32 1326507024, %v174
    %v190 = vor.u32 %v188, %v189
    %vm191 = vcmp.lt.s32.totalorder %v172, 1
    %vm192 = vcmp.lt.s32.totalorder %v172, 2
    %vm193 = vcmp.lt.s32.totalorder %v172, 3
    %vm194 = vcmp.lt.s32.totalorder %v172, 4
    %v195 = vsel %vm191, %v175, %v178
    %v196 = vsel %vm194, %v184, 2102212464
    %v197 = vsel %vm193, %v181, %v196
    %v198 = vsel %vm192, %v195, %v197
    %v199 = vsel %vm191, %v178, %v181
    %v200 = vsel %vm194, %v187, 920167782
    %v201 = vsel %vm193, %v184, %v200
    %v202 = vsel %vm192, %v199, %v201
    %v203 = vsel %vm191, %v181, %v184
    %v204 = vsel %vm194, %v190, 1326507024
    %v205 = vsel %vm193, %v187, %v204
    %v206 = vsel %vm192, %v203, %v205
    %v207 = vshll.u32 %v167, 8
    %v208 = vmul.u32.u64.compose %v207, %v206
    %v209 = vextract.low.u32 %v208
    %v210 = vextract.high.u32 %v208
    %v211 = vmul.u32.u64.compose %v207, %v202
    %v212 = vextract.low.u32 %v211
    %v213 = vextract.high.u32 %v211
    %v214 = vmul.u32 %v207, %v198
    %v215 = vadd.s32 %v210, %v212
    %vm216 = vc.u32 %v210, %v212
    %v217 = vadd.s32 %v213, 1
    %v218 = vsel %vm216, %v217, %v213
    %v219 = vadd.s32 %v214, %v218
    %v220 = vadd.s32 %v219, 536870912
    %v221 = vshrl.u32 %v220, 30
    %v222 = vshll.u32 %v221, 30
    %v223 = vsub.s32 %v219, %v222
    %vm224 = vcmp.lt.s32.totalorder %v223, 0
    %v225 = vsub.s32 0, %v223
    %v226 = vsel %vm224, %v225, %v223
    %v227 = vclz %v226
    %v228 = vsub.s32 %v227, 2
    %vm229 = vcmp.gt.s32.totalorder 0, %v228
    %v230 = vsel %vm229, 0, %v228
    %v231 = vsub.s32 32, %v230
    %v232 = vshll.u32 %v223, %v230
    %v233 = vshrl.u32 %v215, %v231
    %v234 = vor.u32 %v232, %v233
    %v235 = vsub.s32 4294967266, %v230
    %v236 = vadd.s32 %v235, 127
    %v237 = vshll.u32 %v236, 23
    %v238 = vor.u32 4788187, %v237
    %v239 = vand.u32 2147483647, %v238
    %v241 = vcvt.s32.f32 %v234
    %v242 = vmul.f32 %v241, %v239
    %v243 = vxor.u32 %v242, 2147483648
    %v244 = vsel %vm161, %v243, %v242
    %v245 = vsub.s32 4, %v221
    %v246 = vsel %vm161, %v245, %v221
    %v247 = vsel %vm160, %v141, %v244
    %v248 = vsel %vm160, 0, %v246
    %v249 = vcosq.f32.pop %v247
    %v250 = vsinq.f32.pop %v247
    %vm251 = vweird.f32 %v141
    %v252 = vadd.s32 %v248, 3
    %v253 = vand.u32 %v252, 3
    %vm254 = vcmp.lt.s32.totalorder %v253, 2
    %vm255 = vcmp.eq.s32.totalorder %v253, 0
    %v256 = vxor.u32 %v250, 2147483648
    %v257 = vsel %vm255, %v249, %v256
    %vm258 = vcmp.eq.s32.totalorder %v253, 2
    %v259 = vxor.u32 %v249, 2147483648
    %v260 = vsel %vm258, %v259, %v250
    %v261 = vsel %vm254, %v257, %v260
    %v262 = vsel %vm251, nan, %v261
    %v263 = vand.u32 2147483647, %v146
    %vm264 = vcmp.le.f32.partialorder %v263, 0.7853982
    %vm265 = vcmp.lt.s32.totalorder %v146, 0
    %v266 = vand.u32 %v146, 2139095040
    %v267 = vshrl.u32 %v266, 23
    %v268 = vsub.s32 %v267, 127
    %v269 = vand.u32 2147483647, %v146
    %v270 = vand.u32 %v269, 8388607
    %v271 = vor.u32 %v270, 8388608
    %v272 = vsub.s32 0, %v271
    %v273 = vadd.s32 %v268, 1
    %vm274 = vcmp.gt.s32.totalorder %v273, 0
    %v275 = vsel %vm274, %v273, 0
    %v276 = vshrl.u32 %v275, 5
    %v277 = vand.u32 %v275, 31
    %v278 = vsub.s32 32, %v277
    %v279 = vshrl.u32 683565275, %v278
    %v280 = vshll.u32 683565275, %v277
    %v281 = vshrl.u32 2475754826, %v278
    %v282 = vor.u32 %v280, %v281
    %v283 = vshll.u32 2475754826, %v277
    %v284 = vshrl.u32 2131351028, %v278
    %v285 = vor.u32 %v283, %v284
    %v286 = vshll.u32 2131351028, %v277
    %v287 = vshrl.u32 2102212464, %v278
    %v288 = vor.u32 %v286, %v287
    %v289 = vshll.u32 2102212464, %v277
    %v290 = vshrl.u32 920167782, %v278
    %v291 = vor.u32 %v289, %v290
    %v292 = vshll.u32 920167782, %v277
    %v293 = vshrl.u32 1326507024, %v278
    %v294 = vor.u32 %v292, %v293
    %vm295 = vcmp.lt.s32.totalorder %v276, 1
    %vm296 = vcmp.lt.s32.totalorder %v276, 2
    %vm297 = vcmp.lt.s32.totalorder %v276, 3
    %vm298 = vcmp.lt.s32.totalorder %v276, 4
    %v299 = vsel %vm295, %v279, %v282
    %v300 = vsel %vm298, %v288, 2102212464
    %v301 = vsel %vm297, %v285, %v300
    %v302 = vsel %vm296, %v299, %v301
    %v303 = vsel %vm295, %v282, %v285
    %v304 = vsel %vm298, %v291, 920167782
    %v305 = vsel %vm297, %v288, %v304
    %v306 = vsel %vm296, %v303, %v305
    %v307 = vsel %vm295, %v285, %v288
    %v308 = vsel %vm298, %v294, 1326507024
    %v309 = vsel %vm297, %v291, %v308
    %v310 = vsel %vm296, %v307, %v309
    %v311 = vshll.u32 %v271, 8
    %v312 = vmul.u32.u64.compose %v311, %v310
    %v313 = vextract.low.u32 %v312
    %v314 = vextract.high.u32 %v312
    %v315 = vmul.u32.u64.compose %v311, %v306
    %v316 = vextract.low.u32 %v315
    %v317 = vextract.high.u32 %v315
    %v318 = vmul.u32 %v311, %v302
    %v319 = vadd.s32 %v314, %v316
    %vm320 = vc.u32 %v314, %v316
    %v321 = vadd.s32 %v317, 1
    %v322 = vsel %vm320, %v321, %v317
    %v323 = vadd.s32 %v318, %v322
    %v324 = vadd.s32 %v323, 536870912
    %v325 = vshrl.u32 %v324, 30
    %v326 = vshll.u32 %v325, 30
    %v327 = vsub.s32 %v323, %v326
    %vm328 = vcmp.lt.s32.totalorder %v327, 0
    %v329 = vsub.s32 0, %v327
    %v330 = vsel %vm328, %v329, %v327
    %v331 = vclz %v330
    %v332 = vsub.s32 %v331, 2
    %vm333 = vcmp.gt.s32.totalorder 0, %v332
    %v334 = vsel %vm333, 0, %v332
    %v335 = vsub.s32 32, %v334
    %v336 = vshll.u32 %v327, %v334
    %v337 = vshrl.u32 %v319, %v335
    %v338 = vor.u32 %v336, %v337
    %v339 = vsub.s32 4294967266, %v334
    %v340 = vadd.s32 %v339, 127
    %v341 = vshll.u32 %v340, 23
    %v342 = vor.u32 4788187, %v341
    %v343 = vand.u32 2147483647, %v342
    %v345 = vcvt.s32.f32 %v338
    %v346 = vmul.f32 %v345, %v343
    %v347 = vxor.u32 %v346, 2147483648
    %v348 = vsel %vm265, %v347, %v346
    %v349 = vsub.s32 4, %v325
    %v350 = vsel %vm265, %v349, %v325
    %v351 = vsel %vm264, %v146, %v348
    %v352 = vsel %vm264, 0, %v350
    %v353 = vcosq.f32.pop %v351
    %v354 = vsinq.f32.pop %v351
    %vm355 = vweird.f32 %v146
    %v356 = vadd.s32 %v352, 3
    %v357 = vand.u32 %v356, 3
    %vm358 = vcmp.lt.s32.totalorder %v357, 2
    %vm359 = vcmp.eq.s32.totalorder %v357, 0
    %v360 = vxor.u32 %v354, 2147483648
    %v361 = vsel %vm359, %v353, %v360
    %vm362 = vcmp.eq.s32.totalorder %v357, 2
    %v363 = vxor.u32 %v353, 2147483648
    %v364 = vsel %vm362, %v363, %v354
    %v365 = vsel %vm358, %v361, %v364
    %v366 = vsel %vm355, nan, %v365
    %v367 = vand.u32 2147483647, %v151
    %vm368 = vcmp.le.f32.partialorder %v367, 0.7853982
    %vm369 = vcmp.lt.s32.totalorder %v151, 0
    %v370 = vand.u32 %v151, 2139095040
    %v371 = vshrl.u32 %v370, 23
    %v372 = vsub.s32 %v371, 127
    %v373 = vand.u32 2147483647, %v151
    %v374 = vand.u32 %v373, 8388607
    %v375 = vor.u32 %v374, 8388608
    %v376 = vsub.s32 0, %v375
    %v377 = vadd.s32 %v372, 1
    %vm378 = vcmp.gt.s32.totalorder %v377, 0
    %v379 = vsel %vm378, %v377, 0
    %v380 = vshrl.u32 %v379, 5
    %v381 = vand.u32 %v379, 31
    %v382 = vsub.s32 32, %v381
    %v383 = vshrl.u32 683565275, %v382
    %v384 = vshll.u32 683565275, %v381
    %v385 = vshrl.u32 2475754826, %v382
    %v386 = vor.u32 %v384, %v385
    %v387 = vshll.u32 2475754826, %v381
    %v388 = vshrl.u32 2131351028, %v382
    %v389 = vor.u32 %v387, %v388
    %v390 = vshll.u32 2131351028, %v381
    %v391 = vshrl.u32 2102212464, %v382
    %v392 = vor.u32 %v390, %v391
    %v393 = vshll.u32 2102212464, %v381
    %v394 = vshrl.u32 920167782, %v382
    %v395 = vor.u32 %v393, %v394
    %v396 = vshll.u32 920167782, %v381
    %v397 = vshrl.u32 1326507024, %v382
    %v398 = vor.u32 %v396, %v397
    %vm399 = vcmp.lt.s32.totalorder %v380, 1
    %vm400 = vcmp.lt.s32.totalorder %v380, 2
    %vm401 = vcmp.lt.s32.totalorder %v380, 3
    %vm402 = vcmp.lt.s32.totalorder %v380, 4
    %v403 = vsel %vm399, %v383, %v386
    %v404 = vsel %vm402, %v392, 2102212464
    %v405 = vsel %vm401, %v389, %v404
    %v406 = vsel %vm400, %v403, %v405
    %v407 = vsel %vm399, %v386, %v389
    %v408 = vsel %vm402, %v395, 920167782
    %v409 = vsel %vm401, %v392, %v408
    %v410 = vsel %vm400, %v407, %v409
    %v411 = vsel %vm399, %v389, %v392
    %v412 = vsel %vm402, %v398, 1326507024
    %v413 = vsel %vm401, %v395, %v412
    %v414 = vsel %vm400, %v411, %v413
    %v415 = vshll.u32 %v375, 8
    %v416 = vmul.u32.u64.compose %v415, %v414
    %v417 = vextract.low.u32 %v416
    %v418 = vextract.high.u32 %v416
    %v419 = vmul.u32.u64.compose %v415, %v410
    %v420 = vextract.low.u32 %v419
    %v421 = vextract.high.u32 %v419
    %v422 = vmul.u32 %v415, %v406
    %v423 = vadd.s32 %v418, %v420
    %vm424 = vc.u32 %v418, %v420
    %v425 = vadd.s32 %v421, 1
    %v426 = vsel %vm424, %v425, %v421
    %v427 = vadd.s32 %v422, %v426
    %v428 = vadd.s32 %v427, 536870912
    %v429 = vshrl.u32 %v428, 30
    %v430 = vshll.u32 %v429, 30
    %v431 = vsub.s32 %v427, %v430
    %vm432 = vcmp.lt.s32.totalorder %v431, 0
    %v433 = vsub.s32 0, %v431
    %v434 = vsel %vm432, %v433, %v431
    %v435 = vclz %v434
    %v436 = vsub.s32 %v435, 2
    %vm437 = vcmp.gt.s32.totalorder 0, %v436
    %v438 = vsel %vm437, 0, %v436
    %v439 = vsub.s32 32, %v438
    %v440 = vshll.u32 %v431, %v438
    %v441 = vshrl.u32 %v423, %v439
    %v442 = vor.u32 %v440, %v441
    %v443 = vsub.s32 4294967266, %v438
    %v444 = vadd.s32 %v443, 127
    %v445 = vshll.u32 %v444, 23
    %v446 = vor.u32 4788187, %v445
    %v447 = vand.u32 2147483647, %v446
    %v449 = vcvt.s32.f32 %v442
    %v450 = vmul.f32 %v449, %v447
    %v451 = vxor.u32 %v450, 2147483648
    %v452 = vsel %vm369, %v451, %v450
    %v453 = vsub.s32 4, %v429
    %v454 = vsel %vm369, %v453, %v429
    %v455 = vsel %vm368, %v151, %v452
    %v456 = vsel %vm368, 0, %v454
    %v457 = vcosq.f32.pop %v455
    %v458 = vsinq.f32.pop %v455
    %vm459 = vweird.f32 %v151
    %v460 = vadd.s32 %v456, 3
    %v461 = vand.u32 %v460, 3
    %vm462 = vcmp.lt.s32.totalorder %v461, 2
    %vm463 = vcmp.eq.s32.totalorder %v461, 0
    %v464 = vxor.u32 %v458, 2147483648
    %v465 = vsel %vm463, %v457, %v464
    %vm466 = vcmp.eq.s32.totalorder %v461, 2
    %v467 = vxor.u32 %v457, 2147483648
    %v468 = vsel %vm466, %v467, %v458
    %v469 = vsel %vm462, %v465, %v468
    %v470 = vsel %vm459, nan, %v469
    %v471 = vand.u32 2147483647, %v156
    %vm472 = vcmp.le.f32.partialorder %v471, 0.7853982
    %vm473 = vcmp.lt.s32.totalorder %v156, 0
    %v474 = vand.u32 %v156, 2139095040
    %v475 = vshrl.u32 %v474, 23
    %v476 = vsub.s32 %v475, 127
    %v477 = vand.u32 2147483647, %v156
    %v478 = vand.u32 %v477, 8388607
    %v479 = vor.u32 %v478, 8388608
    %v480 = vsub.s32 0, %v479
    %v481 = vadd.s32 %v476, 1
    %vm482 = vcmp.gt.s32.totalorder %v481, 0
    %v483 = vsel %vm482, %v481, 0
    %v484 = vshrl.u32 %v483, 5
    %v485 = vand.u32 %v483, 31
    %v486 = vsub.s32 32, %v485
    %v487 = vshrl.u32 683565275, %v486
    %v488 = vshll.u32 683565275, %v485
    %v489 = vshrl.u32 2475754826, %v486
    %v490 = vor.u32 %v488, %v489
    %v491 = vshll.u32 2475754826, %v485
    %v492 = vshrl.u32 2131351028, %v486
    %v493 = vor.u32 %v491, %v492
    %v494 = vshll.u32 2131351028, %v485
    %v495 = vshrl.u32 2102212464, %v486
    %v496 = vor.u32 %v494, %v495
    %v497 = vshll.u32 2102212464, %v485
    %v498 = vshrl.u32 920167782, %v486
    %v499 = vor.u32 %v497, %v498
    %v500 = vshll.u32 920167782, %v485
    %v501 = vshrl.u32 1326507024, %v486
    %v502 = vor.u32 %v500, %v501
    %vm503 = vcmp.lt.s32.totalorder %v484, 1
    %vm504 = vcmp.lt.s32.totalorder %v484, 2
    %vm505 = vcmp.lt.s32.totalorder %v484, 3
    %vm506 = vcmp.lt.s32.totalorder %v484, 4
    %v507 = vsel %vm503, %v487, %v490
    %v508 = vsel %vm506, %v496, 2102212464
    %v509 = vsel %vm505, %v493, %v508
    %v510 = vsel %vm504, %v507, %v509
    %v511 = vsel %vm503, %v490, %v493
    %v512 = vsel %vm506, %v499, 920167782
    %v513 = vsel %vm505, %v496, %v512
    %v514 = vsel %vm504, %v511, %v513
    %v515 = vsel %vm503, %v493, %v496
    %v516 = vsel %vm506, %v502, 1326507024
    %v517 = vsel %vm505, %v499, %v516
    %v518 = vsel %vm504, %v515, %v517
    %v519 = vshll.u32 %v479, 8
    %v520 = vmul.u32.u64.compose %v519, %v518
    %v521 = vextract.low.u32 %v520
    %v522 = vextract.high.u32 %v520
    %v523 = vmul.u32.u64.compose %v519, %v514
    %v524 = vextract.low.u32 %v523
    %v525 = vextract.high.u32 %v523
    %v526 = vmul.u32 %v519, %v510
    %v527 = vadd.s32 %v522, %v524
    %vm528 = vc.u32 %v522, %v524
    %v529 = vadd.s32 %v525, 1
    %v530 = vsel %vm528, %v529, %v525
    %v531 = vadd.s32 %v526, %v530
    %v532 = vadd.s32 %v531, 536870912
    %v533 = vshrl.u32 %v532, 30
    %v534 = vshll.u32 %v533, 30
    %v535 = vsub.s32 %v531, %v534
    %vm536 = vcmp.lt.s32.totalorder %v535, 0
    %v537 = vsub.s32 0, %v535
    %v538 = vsel %vm536, %v537, %v535
    %v539 = vclz %v538
    %v540 = vsub.s32 %v539, 2
    %vm541 = vcmp.gt.s32.totalorder 0, %v540
    %v542 = vsel %vm541, 0, %v540
    %v543 = vsub.s32 32, %v542
    %v544 = vshll.u32 %v535, %v542
    %v545 = vshrl.u32 %v527, %v543
    %v546 = vor.u32 %v544, %v545
    %v547 = vsub.s32 4294967266, %v542
    %v548 = vadd.s32 %v547, 127
    %v549 = vshll.u32 %v548, 23
    %v550 = vor.u32 4788187, %v549
    %v551 = vand.u32 2147483647, %v550
    %v553 = vcvt.s32.f32 %v546
    %v554 = vmul.f32 %v553, %v551
    %v555 = vxor.u32 %v554, 2147483648
    %v556 = vsel %vm473, %v555, %v554
    %v557 = vsub.s32 4, %v533
    %v558 = vsel %vm473, %v557, %v533
    %v559 = vsel %vm472, %v156, %v556
    %v560 = vsel %vm472, 0, %v558
    %v561 = vcosq.f32.pop %v559
    %v562 = vsinq.f32.pop %v559
    %vm563 = vweird.f32 %v156
    %v564 = vadd.s32 %v560, 3
    %v565 = vand.u32 %v564, 3
    %vm566 = vcmp.lt.s32.totalorder %v565, 2
    %vm567 = vcmp.eq.s32.totalorder %v565, 0
    %v568 = vxor.u32 %v562, 2147483648
    %v569 = vsel %vm567, %v561, %v568
    %vm570 = vcmp.eq.s32.totalorder %v565, 2
    %v571 = vxor.u32 %v561, 2147483648
    %v572 = vsel %vm570, %v571, %v562
    %v573 = vsel %vm566, %v569, %v572
    %v574 = vsel %vm563, nan, %v573
    %v575 = vld [vmem:[%s3] sm:$0xff]
    %v576 = vld [vmem:[%s3 + $0x8] sm:$0xff]
    %v577 = vld [vmem:[%s3 + $0x10] sm:$0xff]
    %v578 = vld [vmem:[%s3 + $0x18] sm:$0xff]
    %v579 = vld [vmem:[%s4] sm:$0xff]
    %v580 = vld [vmem:[%s4 + $0x8] sm:$0xff]
    %v581 = vld [vmem:[%s4 + $0x10] sm:$0xff]
    %v582 = vld [vmem:[%s4 + $0x18] sm:$0xff]
    %584 = vset.pattern.permute.xlu0 0
    %585 = vperm.xlu0 %584, %v579
    %v586 = vpop.permute.xlu0 %585
    %589 = vset.pattern.permute.xlu0 0
    %590 = vperm.xlu0 %589, %v580
    %v591 = vpop.permute.xlu0 %590
    %594 = vset.pattern.permute.xlu0 0
    %595 = vperm.xlu0 %594, %v581
    %v596 = vpop.permute.xlu0 %595
    %599 = vset.pattern.permute.xlu0 0
    %600 = vperm.xlu0 %599, %v582
    %v601 = vpop.permute.xlu0 %600
    %vm603 = vcmask 261120
    %v605 = vsel %vm603, %v575, 0
    %v608 = vsel %vm603, %v576, 0
    %v611 = vsel %vm603, %v577, 0
    %v614 = vsel %vm603, %v578, 0
    %616 = vmatprep.subr.mxu0 0.0
    %617 = vmatpush1.msra.mxu0 %v262
    %618 = vmatprep.subr.mxu0 0.0
    %619 = vmatpush1.msra.mxu0 %v366
    %620 = vmatprep.subr.mxu0 0.0
    %621 = vmatpush1.msra.mxu0 %v470
    %622 = vmatprep.subr.mxu0 0.0
    %623 = vmatpush1.msra.mxu0 %v574
    %624 = vmatprep.subr.mxu0 0.0
    %625 = vmatpush1.msra.mxu0 0.0
    %626 = vmatprep.subr.mxu0 0.0
    %627 = vmatpush1.msra.mxu0 0.0
    %628 = vmatprep.subr.mxu0 0.0
    %629 = vmatpush1.msra.mxu0 0.0
    %630 = vmatprep.subr.mxu0 0.0
    %631 = vmatpush1.msra.mxu0 0.0
    %632 = vmatprep.subr.mxu0 0.0
    %633 = vmatpush1.msra.mxu0 0.0
    %634 = vmatprep.subr.mxu0 0.0
    %635 = vmatpush1.msra.mxu0 0.0
    %636 = vmatprep.subr.mxu0 0.0
    %637 = vmatpush1.msra.mxu0 0.0
    %638 = vmatprep.subr.mxu0 0.0
    %639 = vmatpush1.msra.mxu0 0.0
    %640 = vmatprep.subr.mxu0 0.0
    %641 = vmatpush1.msra.mxu0 0.0
    %642 = vmatprep.subr.mxu0 0.0
    %643 = vmatpush1.msra.mxu0 0.0
    %644 = vmatprep.subr.mxu0 0.0
    %645 = vmatpush1.msra.mxu0 0.0
    %646 = vmatprep.subr.mxu0 0.0
    %647 = vmatpush1.msra.mxu0 0.0
    %648 = vmatprep.subr.mxu0 0.0
    %649 = vmatpush1.msra.mxu0 0.0
    %650 = vmatprep.subr.mxu0 0.0
    %651 = vmatpush1.msra.mxu0 0.0
    %652 = vmatprep.subr.mxu0 0.0
    %653 = vmatpush1.msra.mxu0 0.0
    %654 = vmatprep.subr.mxu0 0.0
    %655 = vmatpush1.msra.mxu0 0.0
    %656 = vmatprep.subr.mxu0 0.0
    %657 = vmatpush1.msra.mxu0 0.0
    %658 = vmatprep.subr.mxu0 0.0
    %659 = vmatpush1.msra.mxu0 0.0
    %660 = vmatprep.subr.mxu0 0.0
    %661 = vmatpush1.msra.mxu0 0.0
    %662 = vmatprep.subr.mxu0 0.0
    %663 = vmatpush1.msra.mxu0 0.0
    %664 = vmatprep.subr.mxu0 0.0
    %665 = vmatpush1.msra.mxu0 0.0
    %666 = vmatprep.subr.mxu0 0.0
    %667 = vmatpush1.msra.mxu0 0.0
    %668 = vmatprep.subr.mxu0 0.0
    %669 = vmatpush1.msra.mxu0 0.0
    %670 = vmatprep.subr.mxu0 0.0
    %671 = vmatpush1.msra.mxu0 0.0
    %672 = vmatprep.subr.mxu0 0.0
    %673 = vmatpush1.msra.mxu0 0.0
    %674 = vmatprep.subr.mxu0 0.0
    %675 = vmatpush1.msra.mxu0 0.0
    %676 = vmatprep.subr.mxu0 0.0
    %677 = vmatpush1.msra.mxu0 0.0
    %678 = vmatprep.subr.mxu0 0.0
    %679 = vmatpush1.msra.mxu0 0.0
    %680 = vmatprep.mubr.f32.mxu0 0.0
    %681 = vmatmul.mubr.f32.gmra.mrb[0].mxu0 %v605
    %v682 = vpop.f32.mrb[0].mxu0
    %v683 = vadd.f32 %v586, %v682
    %v684 = vpop.f32.mrb[0].mxu0
    %685 = vmatprep.mubr.f32.mxu0 0.0
    %686 = vmatmul.mubr.f32.gmra.mrb[0].mxu0 %v608
    %v687 = vpop.f32.mrb[0].mxu0
    %v688 = vadd.f32 %v591, %v687
    %v689 = vpop.f32.mrb[0].mxu0
    %690 = vmatprep.mubr.f32.mxu0 0.0
    %691 = vmatmul.mubr.f32.gmra.mrb[0].mxu0 %v611
    %v692 = vpop.f32.mrb[0].mxu0
    %v693 = vadd.f32 %v596, %v692
    %v694 = vpop.f32.mrb[0].mxu0
    %695 = vmatprep.mubr.f32.mxu0 0.0
    %696 = vmatmul.mubr.f32.gmra.mrb[0].mxu0 %v614
    %v697 = vpop.f32.mrb[0].mxu0
    %v698 = vadd.f32 %v601, %v697
    %v699 = vpop.f32.mrb[0].mxu0
    %700 = vdwg.mxu0
    %v701 = vmul.f32 %v683, 0.5
    %v702 = vmul.f32 %v688, 0.5
    %v703 = vmul.f32 %v693, 0.5
    %v704 = vmul.f32 %v698, 0.5
    %v705 = vmul.f32 %v683, 0.70710677
    %v706 = vmul.f32 %v688, 0.70710677
    %v707 = vmul.f32 %v693, 0.70710677
    %v708 = vmul.f32 %v698, 0.70710677
    %v709 = verf.f32.pop %v705
    %v710 = verf.f32.pop %v706
    %v711 = verf.f32.pop %v707
    %v712 = verf.f32.pop %v708
    %v713 = vadd.f32 %v709, 1.0
    %v714 = vadd.f32 %v710, 1.0
    %v715 = vadd.f32 %v711, 1.0
    %v716 = vadd.f32 %v712, 1.0
    %v717 = vmul.f32 %v701, %v713
    %v718 = vmul.f32 %v702, %v714
    %v719 = vmul.f32 %v703, %v715
    %v720 = vmul.f32 %v704, %v716
    %v721 = vld [vmem:[%s5] sm:$0x1]
    %v722 = vld [vmem:[#allocation2] sm:$0x1]
    %724 = vset.pattern.permute.xlu0 0
    %725 = vperm.xlu0 %724, %v722
    %v726 = vpop.permute.xlu0 %725
    %v728 = vlaneseq
    %v729 = vshrl.u32 %v728, 7
    %v730 = vsub.s32 0, %v729
    %v731 = vrot.slane %v726, %v730
    %v733 = vsel %vm603, %v721, 0
    %735 = vmatprep.subr.mxu0 0.0
    %736 = vmatpush1.msra.mxu0 %v717
    %737 = vmatprep.subr.mxu0 0.0
    %738 = vmatpush1.msra.mxu0 %v718
    %739 = vmatprep.subr.mxu0 0.0
    %740 = vmatpush1.msra.mxu0 %v719
    %741 = vmatprep.subr.mxu0 0.0
    %742 = vmatpush1.msra.mxu0 %v720
    %743 = vmatprep.subr.mxu0 0.0
    %744 = vmatpush1.msra.mxu0 0.0
    %745 = vmatprep.subr.mxu0 0.0
    %746 = vmatpush1.msra.mxu0 0.0
    %747 = vmatprep.subr.mxu0 0.0
    %748 = vmatpush1.msra.mxu0 0.0
    %749 = vmatprep.subr.mxu0 0.0
    %750 = vmatpush1.msra.mxu0 0.0
    %751 = vmatprep.subr.mxu0 0.0
    %752 = vmatpush1.msra.mxu0 0.0
    %753 = vmatprep.subr.mxu0 0.0
    %754 = vmatpush1.msra.mxu0 0.0
    %755 = vmatprep.subr.mxu0 0.0
    %756 = vmatpush1.msra.mxu0 0.0
    %757 = vmatprep.subr.mxu0 0.0
    %758 = vmatpush1.msra.mxu0 0.0
    %759 = vmatprep.subr.mxu0 0.0
    %760 = vmatpush1.msra.mxu0 0.0
    %761 = vmatprep.subr.mxu0 0.0
    %762 = vmatpush1.msra.mxu0 0.0
    %763 = vmatprep.subr.mxu0 0.0
    %764 = vmatpush1.msra.mxu0 0.0
    %765 = vmatprep.subr.mxu0 0.0
    %766 = vmatpush1.msra.mxu0 0.0
    %767 = vmatprep.subr.mxu0 0.0
    %768 = vmatpush1.msra.mxu0 0.0
    %769 = vmatprep.subr.mxu0 0.0
    %770 = vmatpush1.msra.mxu0 0.0
    %771 = vmatprep.subr.mxu0 0.0
    %772 = vmatpush1.msra.mxu0 0.0
    %773 = vmatprep.subr.mxu0 0.0
    %774 = vmatpush1.msra.mxu0 0.0
    %775 = vmatprep.subr.mxu0 0.0
    %776 = vmatpush1.msra.mxu0 0.0
    %777 = vmatprep.subr.mxu0 0.0
    %778 = vmatpush1.msra.mxu0 0.0
    %779 = vmatprep.subr.mxu0 0.0
    %780 = vmatpush1.msra.mxu0 0.0
    %781 = vmatprep.subr.mxu0 0.0
    %782 = vmatpush1.msra.mxu0 0.0
    %783 = vmatprep.subr.mxu0 0.0
    %784 = vmatpush1.msra.mxu0 0.0
    %785 = vmatprep.subr.mxu0 0.0
    %786 = vmatpush1.msra.mxu0 0.0
    %787 = vmatprep.subr.mxu0 0.0
    %788 = vmatpush1.msra.mxu0 0.0
    %789 = vmatprep.subr.mxu0 0.0
    %790 = vmatpush1.msra.mxu0 0.0
    %791 = vmatprep.subr.mxu0 0.0
    %792 = vmatpush1.msra.mxu0 0.0
    %793 = vmatprep.subr.mxu0 0.0
    %794 = vmatpush1.msra.mxu0 0.0
    %795 = vmatprep.subr.mxu0 0.0
    %796 = vmatpush1.msra.mxu0 0.0
    %797 = vmatprep.subr.mxu0 0.0
    %798 = vmatpush1.msra.mxu0 0.0
    %799 = vmatprep.mubr.f32.mxu0 0.0
    %800 = vmatmul.mubr.f32.gmra.mrb[0].mxu0 %v733
    %v801 = vpop.f32.mrb[0].mxu0
    %v802 = vadd.f32 %v731, %v801
    %v803 = vpop.f32.mrb[0].mxu0
    %804 = vdwg.mxu0
    %vm805 = vcmask 57344
    %806 = vst.msk [vmem:[#allocation3] sm:$0x1] %vm805, %v802
    // Predicated region
    $region30: #{fnn_forward.1} parent=1 // pred_check
      _
    $region31: #{fnn_forward.1} parent=1 // pred_check_branch
      %808 = sbr.rel (0) target = $region33
    $region32: #{fnn_forward.1} parent=1 // pred_region
      %s810 = ssub.s32 16, 16
      %811 = vsyncadd [#allocation4], %s810
      %s813 = sshll.u32 [#allocation3], 4
      %s814 = int_to_ptr.vmem [resolvable:$true] %s813
      %816 = dma.vmem_to_hbm [thread:$0]  %s814, 16, %s7, [#allocation4]
    $region33: #{fnn_forward.1} parent=1 // pred_fallthru
      _
    // Predicated region
    $region34: #{fnn_forward.1} parent=1 // pred_check
      _
    $region35: #{fnn_forward.1} parent=1 // pred_check_branch
      %818 = sbr.rel (0) target = $region37
    $region36: #{fnn_forward.1} parent=1 // pred_region
      %819 = dma.done [#allocation4], 16
    $region37: #{fnn_forward.1} parent=1 // pred_fallthru
      _
    %820 = vsyncpa [#allocation4], 1

</llo_original>
